<compile_context>
chip_gen: v5e
topology: v5e:2x2
jax: 0.10.0
libtpu: 0.0.40
codegen_flags: <defaults>
</compile_context>

<pallas_src>
import functools

import jax
import jax.numpy as jnp
from jax.experimental import pallas as pl
from jax.experimental.pallas import tpu as pltpu

IN_FEATURES = 30
H1, H2, H3 = 180, 90, 90
OUT_FEATURES = 48
BN_EPS = 1e-5

# Lane-aligned (multiple-of-128) padded widths used inside the kernel.
P_H1, P_H2, P_H3, P_OUT = 256, 128, 128, 128

MATMUL_DTYPE = jnp.bfloat16   # MXU operand dtype; accumulation / BN stats stay f32.


# --------------------------- per-chip configuration -------------------------

def _device_kind():
    try:
        return jax.devices()[0].device_kind.lower()
    except Exception:
        return ""


def _vmem_capacity_bytes():
    try:
        return int(pltpu.get_tpu_info().vmem_capacity_bytes)
    except Exception:
        # Fallback heuristic: v7x has 64 MiB per TensorCore, older parts 128 MiB.
        return (64 << 20) if "v7" in _device_kind() else (128 << 20)


def _chip_config():
    """Returns (bf16_apply, vmem_budget_bytes, max_batch).

    bf16_apply: run the BN apply + ReLU in packed bf16 (v6e/v7x VPUs have
    bf16; v5e does not, so it keeps the f32 elementwise path).
    """
    kind = _device_kind()
    bf16_apply = "v5" not in kind
    vmem_cap = _vmem_capacity_bytes()
    if vmem_cap <= (64 << 20):          # v7x-class: 64 MiB VMEM per TC
        vmem_budget = 48 << 20
        max_batch = 4096
    else:                               # v5e / v6e: 128 MiB physical VMEM
        vmem_budget = 96 << 20
        max_batch = 10240
    return bf16_apply, vmem_budget, max_batch


# ------------------------------- kernel -------------------------------------

def _bn_relu(h, gamma, beta, bf16_apply):
    """Training-mode BatchNorm1d + ReLU.

    Reductions (sum, sum-of-squares) and the per-feature scale/shift
    a = gamma*rsqrt(var+eps), c = beta - mu*a are computed in f32.
    The wide apply pass (h*a + c, relu, downcast) runs in packed bf16 on
    chips with a bf16 VPU, otherwise in f32 followed by a cast.
    Returns the activation already in MATMUL_DTYPE for the next MXU op.
    """
    inv_n = 1.0 / h.shape[0]                      # static Python constant
    s = jnp.sum(h, axis=0, keepdims=True)
    ss = jnp.sum(h * h, axis=0, keepdims=True)
    mu = s * inv_n
    var = jnp.maximum(ss * inv_n - mu * mu, 0.0)  # guard tiny negative cancellation
    a = gamma * jax.lax.rsqrt(var + BN_EPS)       # rsqrt -> EUP (free slot)
    c = beta - mu * a
    if bf16_apply:
        # Packed bf16 apply: 2x VALU throughput, and the downcast for the next
        # matmul is fused into this pass instead of being a separate sweep.
        h16 = h.astype(MATMUL_DTYPE)
        a16 = a.astype(MATMUL_DTYPE)
        c16 = c.astype(MATMUL_DTYPE)
        return jnp.maximum(h16 * a16 + c16, 0.0)
    return jnp.maximum(h * a + c, 0.0).astype(MATMUL_DTYPE)


def simple_linear_net_kernel(
    x_ref,
    w1_ref, g1_ref, be1_ref,
    w2_ref, g2_ref, be2_ref,
    w3_ref, g3_ref, be3_ref,
    w4_ref, b4_ref,
    out_ref,
    *, bf16_apply,
):
    x = x_ref[...]

    # Embed -> bn1 -> relu   (Embed bias dropped: exactly cancelled by BN mean)
    h = jnp.dot(x.astype(MATMUL_DTYPE), w1_ref[...],
                preferred_element_type=jnp.float32)
    h = _bn_relu(h, g1_ref[...], be1_ref[...], bf16_apply)

    # fc1 -> bn2 -> relu   (bias dropped)
    h = jnp.dot(h, w2_ref[...], preferred_element_type=jnp.float32)
    h = _bn_relu(h, g2_ref[...], be2_ref[...], bf16_apply)

    # fc2 -> bn3 -> relu   (bias dropped)
    h = jnp.dot(h, w3_ref[...], preferred_element_type=jnp.float32)
    h = _bn_relu(h, g3_ref[...], be3_ref[...], bf16_apply)

    # out: bias kept, no activation.  Weight stays lane-dense (128 cols); the
    # store writes only the 48 real output columns (masked vst) so no padded
    # HBM round-trip / wrapper slice is needed.
    y = jnp.dot(h, w4_ref[...], preferred_element_type=jnp.float32) + b4_ref[...]
    out_ref[...] = y[:, :OUT_FEATURES]


def simple_linear_net(x, kernel_params):
    """x: [B, IN_FEATURES] f32 -> [B, OUT_FEATURES] f32 (training-mode BN)."""
    batch = x.shape[0]
    bf16_apply, vmem_budget, max_batch = _chip_config()
    if batch > max_batch:
        # TODO(synk): batches beyond the whole-batch-in-VMEM ceiling need a
        # multi-sweep (stats pass + apply pass) restructure to keep full-batch
        # BatchNorm statistics exact; not implemented here.
        raise ValueError(f"batch {batch} exceeds whole-batch VMEM ceiling {max_batch}")

    # Resident weights ~145 KiB (bf16) + a few activation copies (<~8 KiB/row).
    vmem_limit = int(min(max(batch * 8 * 1024 + (4 << 20), 16 << 20), vmem_budget))

    vmem = pl.BlockSpec(memory_space=pltpu.MemorySpace.VMEM)
    return pl.pallas_call(
        functools.partial(simple_linear_net_kernel, bf16_apply=bf16_apply),
        out_shape=jax.ShapeDtypeStruct((batch, OUT_FEATURES), jnp.float32),
        in_specs=[vmem] * (1 + len(kernel_params)),
        out_specs=vmem,
        compiler_params=pltpu.CompilerParams(vmem_limit_bytes=vmem_limit),
    )(x, *kernel_params)


# ----------------------------- parameters ---------------------------------

def init_torch_params(key):
    """PyTorch-default parameters of SimpleLinearNet (W stored (out, in))."""
    def linear(k, fan_in, fan_out):
        kw, kb = jax.random.split(k)
        bound = 1.0 / jnp.sqrt(jnp.float32(fan_in))
        w = jax.random.uniform(kw, (fan_out, fan_in), jnp.float32, -bound, bound)
        b = jax.random.uniform(kb, (fan_out,), jnp.float32, -bound, bound)
        return w, b

    k1, k2, k3, k4 = jax.random.split(key, 4)
    ew, eb = linear(k1, IN_FEATURES, H1)
    f1w, f1b = linear(k2, H1, H2)
    f2w, f2b = linear(k3, H2, H3)
    ow, ob = linear(k4, H3, OUT_FEATURES)
    return {
        "embed_w": ew, "embed_b": eb,
        "bn1_gamma": jnp.ones((H1,), jnp.float32), "bn1_beta": jnp.zeros((H1,), jnp.float32),
        "fc1_w": f1w, "fc1_b": f1b,
        "bn2_gamma": jnp.ones((H2,), jnp.float32), "bn2_beta": jnp.zeros((H2,), jnp.float32),
        "fc2_w": f2w, "fc2_b": f2b,
        "bn3_gamma": jnp.ones((H3,), jnp.float32), "bn3_beta": jnp.zeros((H3,), jnp.float32),
        "out_w": ow, "out_b": ob,
    }


def _pad2(a, rows, cols):
    return jnp.pad(a, ((0, rows - a.shape[0]), (0, cols - a.shape[1])))


def prepare_kernel_params(p):
    """PyTorch layout -> kernel layout: transpose to (in, out), zero-pad to
    lane-aligned widths, cast matmul weights to bf16.  embed_b / fc1_b / fc2_b
    are intentionally dropped (exactly cancelled by training-mode BatchNorm)."""
    w1 = _pad2(p["embed_w"].T, IN_FEATURES, P_H1).astype(MATMUL_DTYPE)   # (30, 256)
    w2 = _pad2(p["fc1_w"].T, P_H1, P_H2).astype(MATMUL_DTYPE)            # (256, 128)
    w3 = _pad2(p["fc2_w"].T, P_H2, P_H3).astype(MATMUL_DTYPE)            # (128, 128)
    w4 = _pad2(p["out_w"].T, P_H3, P_OUT).astype(MATMUL_DTYPE)           # (128, 128)
    b4 = _pad2(p["out_b"][None, :], 1, P_OUT)                            # f32 (1, 128)
    g1 = _pad2(p["bn1_gamma"][None, :], 1, P_H1)
    be1 = _pad2(p["bn1_beta"][None, :], 1, P_H1)
    g2 = _pad2(p["bn2_gamma"][None, :], 1, P_H2)
    be2 = _pad2(p["bn2_beta"][None, :], 1, P_H2)
    g3 = _pad2(p["bn3_gamma"][None, :], 1, P_H3)
    be3 = _pad2(p["bn3_beta"][None, :], 1, P_H3)
    return (w1, g1, be1, w2, g2, be2, w3, g3, be3, w4, b4)


# ----------------------------- reference -----------------------------------

def reference(x, p, matmul_dtype=jnp.float32):
    """PyTorch-faithful reference (training-mode BN, all biases included).
    `matmul_dtype` lets us match the kernel's bf16 MXU-operand precision."""
    def dot(a, w):  # w is (out, in), PyTorch layout
        return jnp.dot(a.astype(matmul_dtype), w.T.astype(matmul_dtype),
                       preferred_element_type=jnp.float32)

    def bn_relu(h, g, be):
        mu = jnp.mean(h, axis=0, keepdims=True)
        var = jnp.mean((h - mu) ** 2, axis=0, keepdims=True)
        return jnp.maximum((h - mu) / jnp.sqrt(var + BN_EPS) * g + be, 0.0)

    h = bn_relu(dot(x, p["embed_w"]) + p["embed_b"], p["bn1_gamma"], p["bn1_beta"])
    h = bn_relu(dot(h, p["fc1_w"]) + p["fc1_b"], p["bn2_gamma"], p["bn2_beta"])
    h = bn_relu(dot(h, p["fc2_w"]) + p["fc2_b"], p["bn3_gamma"], p["bn3_beta"])
    return dot(h, p["out_w"]) + p["out_b"]


if __name__ == "__main__":
    key = jax.random.PRNGKey(0)
    kx, kp = jax.random.split(key)
    batch = 8
    x = jax.random.normal(kx, (batch, IN_FEATURES), jnp.float32)

    torch_params = init_torch_params(kp)
    kernel_params = prepare_kernel_params(torch_params)

    out = simple_linear_net(x, kernel_params)
    out = jax.block_until_ready(out)
    assert out.shape == (batch, OUT_FEATURES), out.shape

    # Structural check vs. a reference with matching (bf16-operand) matmul
    # precision; remaining differences are tiny rounding effects (dropped
    # pre-BN biases, E[h^2]-mu^2 variance form, packed-bf16 BN apply on
    # v6e/v7x, accumulation order).
    ref_bf16 = reference(x, torch_params, matmul_dtype=MATMUL_DTYPE)
    assert jnp.allclose(out, ref_bf16, atol=3e-2, rtol=3e-2), (
        float(jnp.max(jnp.abs(out - ref_bf16))))

    # Loose sanity check vs. the full-f32 PyTorch-semantics reference
    # (slack covers the bf16 MXU operands).
    ref_f32 = reference(x, torch_params, matmul_dtype=jnp.float32)
    assert jnp.allclose(out, ref_f32, atol=2.5e-1, rtol=2.5e-1), (
        float(jnp.max(jnp.abs(out - ref_f32))))

    print("KERNEL_OK")
</pallas_src>

<mosaic_0001>
module attributes {stable_mosaic.version = 11 : i64} {
  func.func @simple_linear_net_kernel(%arg0: memref<8x30xf32, #tpu.memory_space<vmem>>, %arg1: memref<30x256xbf16, #tpu.memory_space<vmem>>, %arg2: memref<1x256xf32, #tpu.memory_space<vmem>>, %arg3: memref<1x256xf32, #tpu.memory_space<vmem>>, %arg4: memref<256x128xbf16, #tpu.memory_space<vmem>>, %arg5: memref<1x128xf32, #tpu.memory_space<vmem>>, %arg6: memref<1x128xf32, #tpu.memory_space<vmem>>, %arg7: memref<128x128xbf16, #tpu.memory_space<vmem>>, %arg8: memref<1x128xf32, #tpu.memory_space<vmem>>, %arg9: memref<1x128xf32, #tpu.memory_space<vmem>>, %arg10: memref<128x128xbf16, #tpu.memory_space<vmem>>, %arg11: memref<1x128xf32, #tpu.memory_space<vmem>>, %arg12: memref<8x48xf32, #tpu.memory_space<vmem>>) attributes {dimension_semantics = [], scalar_prefetch = 0 : i64, scratch_operands = 0 : i64, tpu.core_type = #tpu.core_type<tc>} {
    %c0 = arith.constant 0 : index
    %c0_0 = arith.constant 0 : index
    %0 = vector.load %arg0[%c0, %c0_0] : memref<8x30xf32, #tpu.memory_space<vmem>>, vector<8x30xf32>
    %1 = arith.truncf %0 : vector<8x30xf32> to vector<8x30xbf16>
    %c0_1 = arith.constant 0 : index
    %c0_2 = arith.constant 0 : index
    %2 = vector.load %arg1[%c0_1, %c0_2] : memref<30x256xbf16, #tpu.memory_space<vmem>>, vector<30x256xbf16>
    %cst = arith.constant dense<0.000000e+00> : vector<8x256xf32>
    %3 = tpu.matmul %1, %2, %cst {dimension_numbers = #tpu.dot_dimension_numbers<[1], [0], [0], [1], [0, 0, 1, 1], [], []>} : vector<8x30xbf16>, vector<30x256xbf16>, vector<8x256xf32> -> vector<8x256xf32>
    %c0_3 = arith.constant 0 : index
    %c0_4 = arith.constant 0 : index
    %4 = vector.load %arg2[%c0_3, %c0_4] : memref<1x256xf32, #tpu.memory_space<vmem>>, vector<1x256xf32>
    %c0_5 = arith.constant 0 : index
    %c0_6 = arith.constant 0 : index
    %5 = vector.load %arg3[%c0_5, %c0_6] : memref<1x256xf32, #tpu.memory_space<vmem>>, vector<1x256xf32>
    %cst_7 = arith.constant dense<0.000000e+00> : vector<256xf32>
    %6 = vector.multi_reduction <add>, %3, %cst_7 [0] : vector<8x256xf32> to vector<256xf32>
    %7 = vector.shape_cast %6 : vector<256xf32> to vector<1x256xf32>
    %8 = arith.mulf %3, %3 : vector<8x256xf32>
    %cst_8 = arith.constant dense<0.000000e+00> : vector<256xf32>
    %9 = vector.multi_reduction <add>, %8, %cst_8 [0] : vector<8x256xf32> to vector<256xf32>
    %10 = vector.shape_cast %9 : vector<256xf32> to vector<1x256xf32>
    %cst_9 = arith.constant 1.250000e-01 : f32
    %11 = vector.broadcast %cst_9 : f32 to vector<1x256xf32>
    %12 = arith.mulf %7, %11 : vector<1x256xf32>
    %cst_10 = arith.constant 1.250000e-01 : f32
    %13 = vector.broadcast %cst_10 : f32 to vector<1x256xf32>
    %14 = arith.mulf %10, %13 : vector<1x256xf32>
    %15 = arith.mulf %12, %12 : vector<1x256xf32>
    %16 = arith.subf %14, %15 : vector<1x256xf32>
    %cst_11 = arith.constant 0.000000e+00 : f32
    %17 = vector.broadcast %cst_11 : f32 to vector<1x256xf32>
    %18 = arith.maximumf %16, %17 : vector<1x256xf32>
    %cst_12 = arith.constant 9.99999974E-6 : f32
    %19 = vector.broadcast %cst_12 : f32 to vector<1x256xf32>
    %20 = arith.addf %18, %19 : vector<1x256xf32>
    %21 = math.rsqrt %20 : vector<1x256xf32>
    %22 = arith.mulf %4, %21 : vector<1x256xf32>
    %23 = arith.mulf %12, %22 : vector<1x256xf32>
    %24 = arith.subf %5, %23 : vector<1x256xf32>
    %25 = arith.truncf %3 : vector<8x256xf32> to vector<8x256xbf16>
    %26 = arith.truncf %22 : vector<1x256xf32> to vector<1x256xbf16>
    %27 = arith.truncf %24 : vector<1x256xf32> to vector<1x256xbf16>
    %28 = vector.broadcast %26 : vector<1x256xbf16> to vector<8x256xbf16>
    %29 = arith.mulf %25, %28 : vector<8x256xbf16>
    %30 = vector.broadcast %27 : vector<1x256xbf16> to vector<8x256xbf16>
    %31 = arith.addf %29, %30 : vector<8x256xbf16>
    %cst_13 = arith.constant 0.000000e+00 : bf16
    %32 = vector.broadcast %cst_13 : bf16 to vector<8x256xbf16>
    %33 = arith.maximumf %31, %32 : vector<8x256xbf16>
    %c0_14 = arith.constant 0 : index
    %c0_15 = arith.constant 0 : index
    %34 = vector.load %arg4[%c0_14, %c0_15] : memref<256x128xbf16, #tpu.memory_space<vmem>>, vector<256x128xbf16>
    %cst_16 = arith.constant dense<0.000000e+00> : vector<8x128xf32>
    %35 = tpu.matmul %33, %34, %cst_16 {dimension_numbers = #tpu.dot_dimension_numbers<[1], [0], [0], [1], [0, 0, 1, 1], [], []>} : vector<8x256xbf16>, vector<256x128xbf16>, vector<8x128xf32> -> vector<8x128xf32>
    %c0_17 = arith.constant 0 : index
    %c0_18 = arith.constant 0 : index
    %36 = vector.load %arg5[%c0_17, %c0_18] : memref<1x128xf32, #tpu.memory_space<vmem>>, vector<1x128xf32>
    %c0_19 = arith.constant 0 : index
    %c0_20 = arith.constant 0 : index
    %37 = vector.load %arg6[%c0_19, %c0_20] : memref<1x128xf32, #tpu.memory_space<vmem>>, vector<1x128xf32>
    %cst_21 = arith.constant dense<0.000000e+00> : vector<128xf32>
    %38 = vector.multi_reduction <add>, %35, %cst_21 [0] : vector<8x128xf32> to vector<128xf32>
    %39 = vector.shape_cast %38 : vector<128xf32> to vector<1x128xf32>
    %40 = arith.mulf %35, %35 : vector<8x128xf32>
    %cst_22 = arith.constant dense<0.000000e+00> : vector<128xf32>
    %41 = vector.multi_reduction <add>, %40, %cst_22 [0] : vector<8x128xf32> to vector<128xf32>
    %42 = vector.shape_cast %41 : vector<128xf32> to vector<1x128xf32>
    %cst_23 = arith.constant 1.250000e-01 : f32
    %43 = vector.broadcast %cst_23 : f32 to vector<1x128xf32>
    %44 = arith.mulf %39, %43 : vector<1x128xf32>
    %cst_24 = arith.constant 1.250000e-01 : f32
    %45 = vector.broadcast %cst_24 : f32 to vector<1x128xf32>
    %46 = arith.mulf %42, %45 : vector<1x128xf32>
    %47 = arith.mulf %44, %44 : vector<1x128xf32>
    %48 = arith.subf %46, %47 : vector<1x128xf32>
    %cst_25 = arith.constant 0.000000e+00 : f32
    %49 = vector.broadcast %cst_25 : f32 to vector<1x128xf32>
    %50 = arith.maximumf %48, %49 : vector<1x128xf32>
    %cst_26 = arith.constant 9.99999974E-6 : f32
    %51 = vector.broadcast %cst_26 : f32 to vector<1x128xf32>
    %52 = arith.addf %50, %51 : vector<1x128xf32>
    %53 = math.rsqrt %52 : vector<1x128xf32>
    %54 = arith.mulf %36, %53 : vector<1x128xf32>
    %55 = arith.mulf %44, %54 : vector<1x128xf32>
    %56 = arith.subf %37, %55 : vector<1x128xf32>
    %57 = arith.truncf %35 : vector<8x128xf32> to vector<8x128xbf16>
    %58 = arith.truncf %54 : vector<1x128xf32> to vector<1x128xbf16>
    %59 = arith.truncf %56 : vector<1x128xf32> to vector<1x128xbf16>
    %60 = vector.broadcast %58 : vector<1x128xbf16> to vector<8x128xbf16>
    %61 = arith.mulf %57, %60 : vector<8x128xbf16>
    %62 = vector.broadcast %59 : vector<1x128xbf16> to vector<8x128xbf16>
    %63 = arith.addf %61, %62 : vector<8x128xbf16>
    %cst_27 = arith.constant 0.000000e+00 : bf16
    %64 = vector.broadcast %cst_27 : bf16 to vector<8x128xbf16>
    %65 = arith.maximumf %63, %64 : vector<8x128xbf16>
    %c0_28 = arith.constant 0 : index
    %c0_29 = arith.constant 0 : index
    %66 = vector.load %arg7[%c0_28, %c0_29] : memref<128x128xbf16, #tpu.memory_space<vmem>>, vector<128x128xbf16>
    %cst_30 = arith.constant dense<0.000000e+00> : vector<8x128xf32>
    %67 = tpu.matmul %65, %66, %cst_30 {dimension_numbers = #tpu.dot_dimension_numbers<[1], [0], [0], [1], [0, 0, 1, 1], [], []>} : vector<8x128xbf16>, vector<128x128xbf16>, vector<8x128xf32> -> vector<8x128xf32>
    %c0_31 = arith.constant 0 : index
    %c0_32 = arith.constant 0 : index
    %68 = vector.load %arg8[%c0_31, %c0_32] : memref<1x128xf32, #tpu.memory_space<vmem>>, vector<1x128xf32>
    %c0_33 = arith.constant 0 : index
    %c0_34 = arith.constant 0 : index
    %69 = vector.load %arg9[%c0_33, %c0_34] : memref<1x128xf32, #tpu.memory_space<vmem>>, vector<1x128xf32>
    %cst_35 = arith.constant dense<0.000000e+00> : vector<128xf32>
    %70 = vector.multi_reduction <add>, %67, %cst_35 [0] : vector<8x128xf32> to vector<128xf32>
    %71 = vector.shape_cast %70 : vector<128xf32> to vector<1x128xf32>
    %72 = arith.mulf %67, %67 : vector<8x128xf32>
    %cst_36 = arith.constant dense<0.000000e+00> : vector<128xf32>
    %73 = vector.multi_reduction <add>, %72, %cst_36 [0] : vector<8x128xf32> to vector<128xf32>
    %74 = vector.shape_cast %73 : vector<128xf32> to vector<1x128xf32>
    %cst_37 = arith.constant 1.250000e-01 : f32
    %75 = vector.broadcast %cst_37 : f32 to vector<1x128xf32>
    %76 = arith.mulf %71, %75 : vector<1x128xf32>
    %cst_38 = arith.constant 1.250000e-01 : f32
    %77 = vector.broadcast %cst_38 : f32 to vector<1x128xf32>
    %78 = arith.mulf %74, %77 : vector<1x128xf32>
    %79 = arith.mulf %76, %76 : vector<1x128xf32>
    %80 = arith.subf %78, %79 : vector<1x128xf32>
    %cst_39 = arith.constant 0.000000e+00 : f32
    %81 = vector.broadcast %cst_39 : f32 to vector<1x128xf32>
    %82 = arith.maximumf %80, %81 : vector<1x128xf32>
    %cst_40 = arith.constant 9.99999974E-6 : f32
    %83 = vector.broadcast %cst_40 : f32 to vector<1x128xf32>
    %84 = arith.addf %82, %83 : vector<1x128xf32>
    %85 = math.rsqrt %84 : vector<1x128xf32>
    %86 = arith.mulf %68, %85 : vector<1x128xf32>
    %87 = arith.mulf %76, %86 : vector<1x128xf32>
    %88 = arith.subf %69, %87 : vector<1x128xf32>
    %89 = arith.truncf %67 : vector<8x128xf32> to vector<8x128xbf16>
    %90 = arith.truncf %86 : vector<1x128xf32> to vector<1x128xbf16>
    %91 = arith.truncf %88 : vector<1x128xf32> to vector<1x128xbf16>
    %92 = vector.broadcast %90 : vector<1x128xbf16> to vector<8x128xbf16>
    %93 = arith.mulf %89, %92 : vector<8x128xbf16>
    %94 = vector.broadcast %91 : vector<1x128xbf16> to vector<8x128xbf16>
    %95 = arith.addf %93, %94 : vector<8x128xbf16>
    %cst_41 = arith.constant 0.000000e+00 : bf16
    %96 = vector.broadcast %cst_41 : bf16 to vector<8x128xbf16>
    %97 = arith.maximumf %95, %96 : vector<8x128xbf16>
    %c0_42 = arith.constant 0 : index
    %c0_43 = arith.constant 0 : index
    %98 = vector.load %arg10[%c0_42, %c0_43] : memref<128x128xbf16, #tpu.memory_space<vmem>>, vector<128x128xbf16>
    %cst_44 = arith.constant dense<0.000000e+00> : vector<8x128xf32>
    %99 = tpu.matmul %97, %98, %cst_44 {dimension_numbers = #tpu.dot_dimension_numbers<[1], [0], [0], [1], [0, 0, 1, 1], [], []>} : vector<8x128xbf16>, vector<128x128xbf16>, vector<8x128xf32> -> vector<8x128xf32>
    %c0_45 = arith.constant 0 : index
    %c0_46 = arith.constant 0 : index
    %100 = vector.load %arg11[%c0_45, %c0_46] : memref<1x128xf32, #tpu.memory_space<vmem>>, vector<1x128xf32>
    %101 = vector.broadcast %100 : vector<1x128xf32> to vector<8x128xf32>
    %102 = arith.addf %99, %101 : vector<8x128xf32>
    %103 = vector.extract_strided_slice %102 {offsets = [0, 0], sizes = [8, 48], strides = [1, 1]} : vector<8x128xf32> to vector<8x48xf32>
    %c0_47 = arith.constant 0 : index
    %c0_48 = arith.constant 0 : index
    %104 = vector.load %arg12[%c0_47, %c0_48] : memref<8x48xf32, #tpu.memory_space<vmem>>, vector<8x48xf32>
    tpu.vector_store %arg12[%c0_47, %c0_48], %103 {strides = array<i32>} : memref<8x48xf32, #tpu.memory_space<vmem>>, vector<8x48xf32>,
    return
  }
}

</mosaic_0001>

<llo_original>
// kernel: tpu_custom_call.1
$region0: #{tpu_custom_call.1}
  #allocation0 [shape = 'u32[]', space=smem, size = 0x4, offset = 0x4, fixed_abs, tag = 'smem constant byte address 0x4 - core index']
  #allocation1 [shape = 'u32[72,128]{1,0:T(1,128)}', space=vmem, size = 0x9000, scoped, tag = 'internal scratch']
  %s0 = inlined_call_operand.hbm [shape: f32[8,30], index: 0, kind: input, shape index: {}]
  %s1 = inlined_call_operand.hbm [shape: bf16[30,256], index: 1, kind: input, shape index: {}]
  %s2 = inlined_call_operand.hbm [shape: f32[1,256], index: 2, kind: input, shape index: {}]
  %s3 = inlined_call_operand.vmem [shape: f32[1,256], index: 3, kind: input, shape index: {}]
  %s4 = inlined_call_operand.hbm [shape: bf16[256,128], index: 4, kind: input, shape index: {}]
  %s5 = inlined_call_operand.vmem [shape: f32[1,128], index: 5, kind: input, shape index: {}]
  %s6 = inlined_call_operand.vmem [shape: f32[1,128], index: 6, kind: input, shape index: {}]
  %s7 = inlined_call_operand.hbm [shape: bf16[128,128], index: 7, kind: input, shape index: {}]
  %s8 = inlined_call_operand.vmem [shape: f32[1,128], index: 8, kind: input, shape index: {}]
  %s9 = inlined_call_operand.vmem [shape: f32[1,128], index: 9, kind: input, shape index: {}]
  %s10 = inlined_call_operand.hbm [shape: bf16[128,128], index: 10, kind: input, shape index: {}]
  %s11 = inlined_call_operand.vmem [shape: f32[1,128], index: 11, kind: input, shape index: {}]
  %s12 = inlined_call_operand.hbm [shape: f32[8,48], index: 12, kind: output, shape index: {}]
  %s13 = sld [smem:[#allocation0]]
  $region82: #{tpu_custom_call.1} parent=0
    _
  %s15 = ssub.s32 1, %s13
  %s16 = scalar_select 0, %s15, %s13
  $region1: #{tpu_custom_call.1} parent=0
    #allocation2 [shape = 'u8[4096]{0}', space=vmem, size = 0x1000, scoped, tag = 'input window, operand 0, single buffered']
    #allocation3 [shape = 's32[1]{0}', space=sflag, size = 0x4, scoped, tag = 'scoped memory for tpu_custom_call.1']
    #allocation4 [shape = 's32[1]{0}', space=sflag, size = 0x4, scoped, tag = 'scoped memory for tpu_custom_call.1']
    #allocation5 [shape = 'u8[16384]{0}', space=vmem, size = 0x4000, scoped, tag = 'input window, operand 1, single buffered']
    #allocation6 [shape = 's32[1]{0}', space=sflag, size = 0x4, scoped, tag = 'scoped memory for tpu_custom_call.1']
    #allocation7 [shape = 'u8[1024]{0}', space=vmem, size = 0x400, scoped, tag = 'input window, operand 2, single buffered']
    #allocation8 [shape = 'u8[65536]{0}', space=vmem, size = 0x10000, scoped, tag = 'input window, operand 4, single buffered']
    #allocation9 [shape = 's32[1]{0}', space=sflag, size = 0x4, scoped, tag = 'scoped memory for tpu_custom_call.1']
    #allocation10 [shape = 'u8[32768]{0}', space=vmem, size = 0x8000, scoped, tag = 'input window, operand 7, single buffered']
    #allocation11 [shape = 'u8[32768]{0}', space=vmem, size = 0x8000, scoped, tag = 'input window, operand 10, single buffered']
    #allocation12 [shape = 's32[1]{0}', space=sflag, size = 0x4, scoped, tag = 'scoped memory for tpu_custom_call.1']
    #allocation13 [shape = 'u8[4096]{0}', space=vmem, size = 0x1000, scoped, tag = 'output window, operand 0, single buffered']
    %17 = vsyncpa [#allocation3], 0
    %18 = vsyncpa [#allocation6], 0
    %19 = vsyncpa [#allocation9], 0
    %20 = vsyncpa [#allocation12], 0
    %21 = vsyncpa [#allocation4], 0
    // Predicated region
    $region2: #{tpu_custom_call.1} parent=1 // pred_check
      _
    $region3: #{tpu_custom_call.1} parent=1 // pred_check_branch
      %23 = sbr.rel (0) target = $region5
    $region4: #{tpu_custom_call.1} parent=1 // pred_region
      %25 = vsyncadd [#allocation3], 0
      %s27 = sshll.u32 %s0, 4
      %s28 = int_to_ptr.hbm [resolvable:$true] %s27
      %s29 = sshll.u32 [#allocation2], 4
      %s30 = int_to_ptr.vmem [resolvable:$true] %s29
      %32 = dma.hbm_to_vmem [thread:$0]  %s28, 128, %s30, [#allocation3]
    $region5: #{tpu_custom_call.1} parent=1 // pred_fallthru
      _
    // Predicated region
    $region6: #{tpu_custom_call.1} parent=1 // pred_check
      _
    $region7: #{tpu_custom_call.1} parent=1 // pred_check_branch
      %34 = sbr.rel (0) target = $region9
    $region8: #{tpu_custom_call.1} parent=1 // pred_region
      %36 = vsyncadd [#allocation6], 0
      %s37 = sshll.u32 %s1, 4
      %s38 = int_to_ptr.hbm [resolvable:$true] %s37
      %s39 = sshll.u32 [#allocation5], 4
      %s40 = int_to_ptr.vmem [resolvable:$true] %s39
      %45 = dma.hbm_to_vmem [thread:$0]  %s38, 512, %s40, [#allocation6], 128, 128, 8
    $region9: #{tpu_custom_call.1} parent=1 // pred_fallthru
      _
    // Predicated region
    $region10: #{tpu_custom_call.1} parent=1 // pred_check
      _
    $region11: #{tpu_custom_call.1} parent=1 // pred_check_branch
      %47 = sbr.rel (0) target = $region13
    $region12: #{tpu_custom_call.1} parent=1 // pred_region
      %49 = vsyncadd [#allocation6], 0
      %s51 = sshll.u32 %s2, 4
      %s52 = int_to_ptr.hbm [resolvable:$true] %s51
      %s53 = sshll.u32 [#allocation7], 4
      %s54 = int_to_ptr.vmem [resolvable:$true] %s53
      %56 = dma.hbm_to_vmem [thread:$0]  %s52, 32, %s54, [#allocation6]
    $region13: #{tpu_custom_call.1} parent=1 // pred_fallthru
      _
    // Predicated region
    $region14: #{tpu_custom_call.1} parent=1 // pred_check
      _
    $region15: #{tpu_custom_call.1} parent=1 // pred_check_branch
      %58 = sbr.rel (0) target = $region17
    $region16: #{tpu_custom_call.1} parent=1 // pred_region
      _
    $region17: #{tpu_custom_call.1} parent=1 // pred_fallthru
      _
    // Predicated region
    $region18: #{tpu_custom_call.1} parent=1 // pred_check
      _
    $region19: #{tpu_custom_call.1} parent=1 // pred_check_branch
      %60 = sbr.rel (0) target = $region21
    $region20: #{tpu_custom_call.1} parent=1 // pred_region
      %62 = vsyncadd [#allocation9], 0
      %s63 = sshll.u32 %s4, 4
      %s64 = int_to_ptr.hbm [resolvable:$true] %s63
      %s65 = sshll.u32 [#allocation8], 4
      %s66 = int_to_ptr.vmem [resolvable:$true] %s65
      %71 = dma.hbm_to_vmem [thread:$0]  %s64, 2048, %s66, [#allocation9], 64, 64, 4
    $region21: #{tpu_custom_call.1} parent=1 // pred_fallthru
      _
    // Predicated region
    $region22: #{tpu_custom_call.1} parent=1 // pred_check
      _
    $region23: #{tpu_custom_call.1} parent=1 // pred_check_branch
      %73 = sbr.rel (0) target = $region25
    $region24: #{tpu_custom_call.1} parent=1 // pred_region
      _
    $region25: #{tpu_custom_call.1} parent=1 // pred_fallthru
      _
    // Predicated region
    $region26: #{tpu_custom_call.1} parent=1 // pred_check
      _
    $region27: #{tpu_custom_call.1} parent=1 // pred_check_branch
      %75 = sbr.rel (0) target = $region29
    $region28: #{tpu_custom_call.1} parent=1 // pred_region
      _
    $region29: #{tpu_custom_call.1} parent=1 // pred_fallthru
      _
    // Predicated region
    $region30: #{tpu_custom_call.1} parent=1 // pred_check
      _
    $region31: #{tpu_custom_call.1} parent=1 // pred_check_branch
      %77 = sbr.rel (0) target = $region33
    $region32: #{tpu_custom_call.1} parent=1 // pred_region
      %79 = vsyncadd [#allocation9], 0
      %s80 = sshll.u32 %s7, 4
      %s81 = int_to_ptr.hbm [resolvable:$true] %s80
      %s82 = sshll.u32 [#allocation10], 4
      %s83 = int_to_ptr.vmem [resolvable:$true] %s82
      %88 = dma.hbm_to_vmem [thread:$0]  %s81, 1024, %s83, [#allocation9], 64, 64, 4
    $region33: #{tpu_custom_call.1} parent=1 // pred_fallthru
      _
    // Predicated region
    $region34: #{tpu_custom_call.1} parent=1 // pred_check
      _
    $region35: #{tpu_custom_call.1} parent=1 // pred_check_branch
      %90 = sbr.rel (0) target = $region37
    $region36: #{tpu_custom_call.1} parent=1 // pred_region
      _
    $region37: #{tpu_custom_call.1} parent=1 // pred_fallthru
      _
    // Predicated region
    $region38: #{tpu_custom_call.1} parent=1 // pred_check
      _
    $region39: #{tpu_custom_call.1} parent=1 // pred_check_branch
      %92 = sbr.rel (0) target = $region41
    $region40: #{tpu_custom_call.1} parent=1 // pred_region
      _
    $region41: #{tpu_custom_call.1} parent=1 // pred_fallthru
      _
    // Predicated region
    $region42: #{tpu_custom_call.1} parent=1 // pred_check
      _
    $region43: #{tpu_custom_call.1} parent=1 // pred_check_branch
      %94 = sbr.rel (0) target = $region45
    $region44: #{tpu_custom_call.1} parent=1 // pred_region
      %96 = vsyncadd [#allocation12], 0
      %s97 = sshll.u32 %s10, 4
      %s98 = int_to_ptr.hbm [resolvable:$true] %s97
      %s99 = sshll.u32 [#allocation11], 4
      %s100 = int_to_ptr.vmem [resolvable:$true] %s99
      %105 = dma.hbm_to_vmem [thread:$0]  %s98, 1024, %s100, [#allocation12], 64, 64, 4
    $region45: #{tpu_custom_call.1} parent=1 // pred_fallthru
      _
    // Predicated region
    $region46: #{tpu_custom_call.1} parent=1 // pred_check
      _
    $region47: #{tpu_custom_call.1} parent=1 // pred_check_branch
      %107 = sbr.rel (0) target = $region49
    $region48: #{tpu_custom_call.1} parent=1 // pred_region
      _
    $region49: #{tpu_custom_call.1} parent=1 // pred_fallthru
      _
    // Predicated region
    $region50: #{tpu_custom_call.1} parent=1 // pred_check
      _
    $region51: #{tpu_custom_call.1} parent=1 // pred_check_branch
      %109 = sbr.rel (0) target = $region53
    $region52: #{tpu_custom_call.1} parent=1 // pred_region
      %111 = dma.done [#allocation3], 128
    $region53: #{tpu_custom_call.1} parent=1 // pred_fallthru
      _
    // Predicated region
    $region54: #{tpu_custom_call.1} parent=1 // pred_check
      _
    $region55: #{tpu_custom_call.1} parent=1 // pred_check_branch
      %113 = sbr.rel (0) target = $region57
    $region56: #{tpu_custom_call.1} parent=1 // pred_region
      %115 = dma.done [#allocation6], 512
    $region57: #{tpu_custom_call.1} parent=1 // pred_fallthru
      _
    // Predicated region
    $region58: #{tpu_custom_call.1} parent=1 // pred_check
      _
    $region59: #{tpu_custom_call.1} parent=1 // pred_check_branch
      %117 = sbr.rel (0) target = $region61
    $region60: #{tpu_custom_call.1} parent=1 // pred_region
      %119 = dma.done [#allocation6], 32
    $region61: #{tpu_custom_call.1} parent=1 // pred_fallthru
      _
    // Predicated region
    $region62: #{tpu_custom_call.1} parent=1 // pred_check
      _
    $region63: #{tpu_custom_call.1} parent=1 // pred_check_branch
      %121 = sbr.rel (0) target = $region65
    $region64: #{tpu_custom_call.1} parent=1 // pred_region
      %123 = dma.done [#allocation9], 2048
    $region65: #{tpu_custom_call.1} parent=1 // pred_fallthru
      _
    // Predicated region
    $region66: #{tpu_custom_call.1} parent=1 // pred_check
      _
    $region67: #{tpu_custom_call.1} parent=1 // pred_check_branch
      %125 = sbr.rel (0) target = $region69
    $region68: #{tpu_custom_call.1} parent=1 // pred_region
      %127 = dma.done [#allocation9], 1024
    $region69: #{tpu_custom_call.1} parent=1 // pred_fallthru
      _
    // Predicated region
    $region70: #{tpu_custom_call.1} parent=1 // pred_check
      _
    $region71: #{tpu_custom_call.1} parent=1 // pred_check_branch
      %129 = sbr.rel (0) target = $region73
    $region72: #{tpu_custom_call.1} parent=1 // pred_region
      %131 = dma.done [#allocation12], 1024
    $region73: #{tpu_custom_call.1} parent=1 // pred_fallthru
      _
    %v133 = vld [vmem:[#allocation2] sm:$0xff]
    %v134 = vpack.c.bf16 %v133, %v133
    %v135 = vld [vmem:[#allocation5] sm:$0xff]
    %v136 = vld [vmem:[#allocation5 + $0x8] sm:$0xff]
    %v137 = vld [vmem:[#allocation5 + $0x10] sm:$0xff]
    %v138 = vld [vmem:[#allocation5 + $0x18] sm:$0x77]
    %v143 = vunpack.c.l.b16 %v135
    %v144 = vunpack.c.h.b16 %v135
    %v145 = vunpack.c.l.b16 %v136
    %v146 = vunpack.c.h.b16 %v136
    %v147 = vunpack.c.l.b16 %v137
    %v148 = vunpack.c.h.b16 %v137
    %v149 = vunpack.c.l.b16 %v138
    %v150 = vunpack.c.h.b16 %v138
    %v151 = vpack.c.b16 %v145, %v143
    %v152 = vpack.c.b16 %v146, %v144
    %v153 = vpack.c.b16 %v149, %v147
    %v154 = vpack.c.b16 %v150, %v148
    %vm157 = vcmask 244736
    %v159 = vsel %vm157, %v134, 0
    %vm161 = vcmask 1046528
    %v163 = vsel %vm161, %v153, 0
    %v166 = vsel %vm161, %v154, 0
    %168 = vmatpush.bf16.msra.mxu0 0
    %169 = vmatpush.bf16.msra.mxu0 0
    %170 = vmatpush.bf16.msra.mxu0 0
    %171 = vmatpush.bf16.msra.mxu0 0
    %172 = vmatpush.bf16.msra.mxu0 0
    %173 = vmatpush.bf16.msra.mxu0 0
    %174 = vmatpush.bf16.msra.mxu0 %v163
    %175 = vmatpush.bf16.msra.mxu0 %v151
    %176 = vmatmul.bf16.gmra.mxu0 %v159
    %v177 = vpop.f32.mrf.mxu0
    %v178 = vadd.f32 0.0, %v177
    %v179 = vpop.f32.mrf.mxu0
    %180 = vdwg.mxu0
    %181 = vmatpush.bf16.msra.mxu0 0
    %182 = vmatpush.bf16.msra.mxu0 0
    %183 = vmatpush.bf16.msra.mxu0 0
    %184 = vmatpush.bf16.msra.mxu0 0
    %185 = vmatpush.bf16.msra.mxu0 0
    %186 = vmatpush.bf16.msra.mxu0 0
    %187 = vmatpush.bf16.msra.mxu0 %v166
    %188 = vmatpush.bf16.msra.mxu0 %v152
    %189 = vmatmul.bf16.gmra.mxu0 %v159
    %v190 = vpop.f32.mrf.mxu0
    %v191 = vadd.f32 0.0, %v190
    %v192 = vpop.f32.mrf.mxu0
    %193 = vdwg.mxu0
    %v194 = vld [vmem:[#allocation7] sm:$0x3]
    %v195 = vld [vmem:[%s3] sm:$0x3]
    %v196 = vrot.slane %v178, 4
    %v197 = vadd.f32 %v178, %v196
    %v198 = vrot.slane %v197, 2
    %v199 = vadd.f32 %v197, %v198
    %v200 = vrot.slane %v199, 1
    %v201 = vadd.f32 %v199, %v200
    %v202 = vrot.slane %v191, 4
    %v203 = vadd.f32 %v191, %v202
    %v204 = vrot.slane %v203, 2
    %v205 = vadd.f32 %v203, %v204
    %v206 = vrot.slane %v205, 1
    %v207 = vadd.f32 %v205, %v206
    %v208 = vmul.f32 %v178, %v178
    %v209 = vmul.f32 %v191, %v191
    %v210 = vrot.slane %v208, 4
    %v211 = vadd.f32 %v208, %v210
    %v212 = vrot.slane %v211, 2
    %v213 = vadd.f32 %v211, %v212
    %v214 = vrot.slane %v213, 1
    %v215 = vadd.f32 %v213, %v214
    %v216 = vrot.slane %v209, 4
    %v217 = vadd.f32 %v209, %v216
    %v218 = vrot.slane %v217, 2
    %v219 = vadd.f32 %v217, %v218
    %v220 = vrot.slane %v219, 1
    %v221 = vadd.f32 %v219, %v220
    %v222 = vmul.f32 %v201, 0.125
    %v223 = vmul.f32 %v207, 0.125
    %v224 = vmul.f32 %v215, 0.125
    %v225 = vmul.f32 %v221, 0.125
    %v226 = vmul.f32 %v222, %v222
    %v227 = vmul.f32 %v223, %v223
    %v228 = vsub.f32 %v224, %v226
    %v229 = vsub.f32 %v225, %v227
    %v230 = vmax.f32 %v228, 0.0
    %v231 = vmax.f32 %v229, 0.0
    %v232 = vadd.f32 %v230, 1e-05
    %v233 = vadd.f32 %v231, 1e-05
    %v234 = vrsqrt.pop %v232
    %v235 = vmul.f32 %v234, %v232
    %v236 = vmul.f32 %v235, %v234
    %v237 = vmul.f32 0.5, %v236
    %v238 = vsub.f32 1.5, %v237
    %v239 = vmul.f32 %v234, %v238
    %vm240 = vweird.f32 %v232
    %vm241 = vweird.f32 %v234
    %vm242 = vmor %vm240, %vm241
    %v243 = vsel %vm242, %v234, %v239
    %v244 = vrsqrt.pop %v233
    %v245 = vmul.f32 %v244, %v233
    %v246 = vmul.f32 %v245, %v244
    %v247 = vmul.f32 0.5, %v246
    %v248 = vsub.f32 1.5, %v247
    %v249 = vmul.f32 %v244, %v248
    %vm250 = vweird.f32 %v233
    %vm251 = vweird.f32 %v244
    %vm252 = vmor %vm250, %vm251
    %v253 = vsel %vm252, %v244, %v249
    %v256 = vrot.slane %v253, 7
    %vm257 = vcmask 1040384
    %v258 = vsel %vm257, %v243, %v256
    %v260 = vmul.f32 %v194, %v258
    %v262 = vperm.slane %v260, 0
    %v263 = vperm.slane %v260, 1
    %v266 = vmul.f32 %v222, %v262
    %v267 = vmul.f32 %v223, %v263
    %v270 = vrot.slane %v267, 7
    %v271 = vsel %vm257, %v266, %v270
    %v273 = vsub.f32 %v195, %v271
    %v274 = vpack.c.bf16 %v191, %v178
    %v275 = vpack.c.bf16 %v263, %v262
    %v277 = vperm.slane %v273, 0
    %v278 = vperm.slane %v273, 1
    %v281 = vpack.c.bf16 %v278, %v277
    %v283 = vunpack.c.l.b16 %v275
    %v284 = vunpack.c.h.b16 %v275
    %v285 = vpack.c.b16 %v283, %v283
    %v286 = vpack.c.b16 %v284, %v284
    %v288 = vpack.i.b16 %v285, %v285
    %v290 = vperm.slane %v288, 0
    %v292 = vpack.i.b16 %v286, %v286
    %v294 = vperm.slane %v292, 0
    %v295 = vunpack.c.l.bf16 %v274
    %v296 = vunpack.c.h.bf16 %v274
    %v297 = vunpack.c.l.bf16 %v290
    %v298 = vunpack.c.l.bf16 %v294
    %v299 = vmul.f32 %v295, %v297
    %v300 = vmul.f32 %v296, %v298
    %v301 = vpack.c.bf16 %v300, %v299
    %v303 = vunpack.c.l.b16 %v281
    %v304 = vunpack.c.h.b16 %v281
    %v305 = vpack.c.b16 %v303, %v303
    %v306 = vpack.c.b16 %v304, %v304
    %v308 = vpack.i.b16 %v305, %v305
    %v310 = vperm.slane %v308, 0
    %v312 = vpack.i.b16 %v306, %v306
    %v314 = vperm.slane %v312, 0
    %v315 = vunpack.c.l.bf16 %v301
    %v316 = vunpack.c.h.bf16 %v301
    %v317 = vunpack.c.l.bf16 %v310
    %v318 = vunpack.c.l.bf16 %v314
    %v319 = vadd.f32 %v315, %v317
    %v320 = vadd.f32 %v316, %v318
    %v321 = vpack.c.bf16 %v320, %v319
    %v322 = vunpack.c.l.bf16 %v321
    %v323 = vunpack.c.h.bf16 %v321
    %v324 = vmax.f32 %v322, 0.0
    %v325 = vmax.f32 %v323, 0.0
    %v326 = vpack.c.bf16 %v324, %v324
    %v327 = vpack.c.bf16 %v325, %v325
    %v328 = vld [vmem:[#allocation8] sm:$0xf]
    %v329 = vld [vmem:[#allocation8 + $0x4] sm:$0xf]
    %v330 = vld [vmem:[#allocation8 + $0x8] sm:$0xf]
    %v331 = vld [vmem:[#allocation8 + $0xc] sm:$0xf]
    %v332 = vld [vmem:[#allocation8 + $0x10] sm:$0xf]
    %v333 = vld [vmem:[#allocation8 + $0x14] sm:$0xf]
    %v334 = vld [vmem:[#allocation8 + $0x18] sm:$0xf]
    %v335 = vld [vmem:[#allocation8 + $0x1c] sm:$0xf]
    %v336 = vld [vmem:[#allocation8 + $0x20] sm:$0xf]
    %v337 = vld [vmem:[#allocation8 + $0x24] sm:$0xf]
    %v338 = vld [vmem:[#allocation8 + $0x28] sm:$0xf]
    %v339 = vld [vmem:[#allocation8 + $0x2c] sm:$0xf]
    %v340 = vld [vmem:[#allocation8 + $0x30] sm:$0xf]
    %v341 = vld [vmem:[#allocation8 + $0x34] sm:$0xf]
    %v342 = vld [vmem:[#allocation8 + $0x38] sm:$0xf]
    %v343 = vld [vmem:[#allocation8 + $0x3c] sm:$0xf]
    %v344 = vld [vmem:[#allocation8 + $0x40] sm:$0xf]
    %v345 = vld [vmem:[#allocation8 + $0x44] sm:$0xf]
    %v346 = vld [vmem:[#allocation8 + $0x48] sm:$0xf]
    %v347 = vld [vmem:[#allocation8 + $0x4c] sm:$0xf]
    %v348 = vld [vmem:[#allocation8 + $0x50] sm:$0xf]
    %v349 = vld [vmem:[#allocation8 + $0x54] sm:$0xf]
    %v350 = vld [vmem:[#allocation8 + $0x58] sm:$0xf]
    %v351 = vld [vmem:[#allocation8 + $0x5c] sm:$0xf]
    %v352 = vld [vmem:[#allocation8 + $0x60] sm:$0xf]
    %v353 = vld [vmem:[#allocation8 + $0x64] sm:$0xf]
    %v354 = vld [vmem:[#allocation8 + $0x68] sm:$0xf]
    %v355 = vld [vmem:[#allocation8 + $0x6c] sm:$0xf]
    %v356 = vld [vmem:[#allocation8 + $0x70] sm:$0xf]
    %v357 = vld [vmem:[#allocation8 + $0x74] sm:$0xf]
    %v358 = vld [vmem:[#allocation8 + $0x78] sm:$0xf]
    %v359 = vld [vmem:[#allocation8 + $0x7c] sm:$0xf]
    %v392 = vunpack.c.l.b16 %v328
    %v393 = vunpack.c.l.b16 %v329
    %v394 = vunpack.c.l.b16 %v330
    %v395 = vunpack.c.l.b16 %v331
    %v396 = vunpack.c.l.b16 %v332
    %v397 = vunpack.c.l.b16 %v333
    %v398 = vunpack.c.l.b16 %v334
    %v399 = vunpack.c.l.b16 %v335
    %v400 = vunpack.c.l.b16 %v336
    %v401 = vunpack.c.l.b16 %v337
    %v402 = vunpack.c.l.b16 %v338
    %v403 = vunpack.c.l.b16 %v339
    %v404 = vunpack.c.l.b16 %v340
    %v405 = vunpack.c.l.b16 %v341
    %v406 = vunpack.c.l.b16 %v342
    %v407 = vunpack.c.l.b16 %v343
    %v408 = vunpack.c.l.b16 %v344
    %v409 = vunpack.c.l.b16 %v345
    %v410 = vunpack.c.l.b16 %v346
    %v411 = vunpack.c.l.b16 %v347
    %v412 = vunpack.c.l.b16 %v348
    %v413 = vunpack.c.l.b16 %v349
    %v414 = vunpack.c.l.b16 %v350
    %v415 = vunpack.c.l.b16 %v351
    %v416 = vunpack.c.l.b16 %v352
    %v417 = vunpack.c.l.b16 %v353
    %v418 = vunpack.c.l.b16 %v354
    %v419 = vunpack.c.l.b16 %v355
    %v420 = vunpack.c.l.b16 %v356
    %v421 = vunpack.c.l.b16 %v357
    %v422 = vunpack.c.l.b16 %v358
    %v423 = vunpack.c.l.b16 %v359
    %v424 = vpack.c.b16 %v393, %v392
    %v425 = vpack.c.b16 %v395, %v394
    %v426 = vpack.c.b16 %v397, %v396
    %v427 = vpack.c.b16 %v399, %v398
    %v428 = vpack.c.b16 %v401, %v400
    %v429 = vpack.c.b16 %v403, %v402
    %v430 = vpack.c.b16 %v405, %v404
    %v431 = vpack.c.b16 %v407, %v406
    %v432 = vpack.c.b16 %v409, %v408
    %v433 = vpack.c.b16 %v411, %v410
    %v434 = vpack.c.b16 %v413, %v412
    %v435 = vpack.c.b16 %v415, %v414
    %v436 = vpack.c.b16 %v417, %v416
    %v437 = vpack.c.b16 %v419, %v418
    %v438 = vpack.c.b16 %v421, %v420
    %v439 = vpack.c.b16 %v423, %v422
    %456 = vmatpush.bf16.msra.mxu0 %v431
    %457 = vmatpush.bf16.msra.mxu0 %v430
    %458 = vmatpush.bf16.msra.mxu0 %v429
    %459 = vmatpush.bf16.msra.mxu0 %v428
    %460 = vmatpush.bf16.msra.mxu0 %v427
    %461 = vmatpush.bf16.msra.mxu0 %v426
    %462 = vmatpush.bf16.msra.mxu0 %v425
    %463 = vmatpush.bf16.msra.mxu0 %v424
    %464 = vmatmul.bf16.gmra.mxu0 %v326
    %v465 = vpop.f32.mrf.mxu0
    %v466 = vadd.f32 0.0, %v465
    %v467 = vpop.f32.mrf.mxu0
    %468 = vdwg.mxu0
    %469 = vmatpush.bf16.msra.mxu0 %v439
    %470 = vmatpush.bf16.msra.mxu0 %v438
    %471 = vmatpush.bf16.msra.mxu0 %v437
    %472 = vmatpush.bf16.msra.mxu0 %v436
    %473 = vmatpush.bf16.msra.mxu0 %v435
    %474 = vmatpush.bf16.msra.mxu0 %v434
    %475 = vmatpush.bf16.msra.mxu0 %v433
    %476 = vmatpush.bf16.msra.mxu0 %v432
    %477 = vmatmul.bf16.gmra.mxu0 %v327
    %v478 = vpop.f32.mrf.mxu0
    %v479 = vadd.f32 %v466, %v478
    %v480 = vpop.f32.mrf.mxu0
    %481 = vdwg.mxu0
    %v482 = vld [vmem:[%s5] sm:$0x1]
    %v483 = vld [vmem:[%s6] sm:$0x1]
    %v484 = vrot.slane %v479, 4
    %v485 = vadd.f32 %v479, %v484
    %v486 = vrot.slane %v485, 2
    %v487 = vadd.f32 %v485, %v486
    %v488 = vrot.slane %v487, 1
    %v489 = vadd.f32 %v487, %v488
    %v490 = vmul.f32 %v479, %v479
    %v491 = vrot.slane %v490, 4
    %v492 = vadd.f32 %v490, %v491
    %v493 = vrot.slane %v492, 2
    %v494 = vadd.f32 %v492, %v493
    %v495 = vrot.slane %v494, 1
    %v496 = vadd.f32 %v494, %v495
    %v497 = vmul.f32 %v489, 0.125
    %v498 = vmul.f32 %v496, 0.125
    %v499 = vmul.f32 %v497, %v497
    %v500 = vsub.f32 %v498, %v499
    %v501 = vmax.f32 %v500, 0.0
    %v502 = vadd.f32 %v501, 1e-05
    %v503 = vrsqrt.pop %v502
    %v504 = vmul.f32 %v503, %v502
    %v505 = vmul.f32 %v504, %v503
    %v506 = vmul.f32 0.5, %v505
    %v507 = vsub.f32 1.5, %v506
    %v508 = vmul.f32 %v503, %v507
    %vm509 = vweird.f32 %v502
    %vm510 = vweird.f32 %v503
    %vm511 = vmor %vm509, %vm510
    %v512 = vsel %vm511, %v503, %v508
    %v513 = vmul.f32 %v482, %v512
    %v514 = vmul.f32 %v497, %v513
    %v515 = vsub.f32 %v483, %v514
    %v516 = vpack.c.bf16 %v479, %v479
    %v517 = vpack.c.bf16 %v513, %v513
    %v518 = vpack.c.bf16 %v515, %v515
    %v520 = vpack.i.b16 %v517, %v517
    %v522 = vperm.slane %v520, 0
    %v523 = vunpack.c.l.bf16 %v516
    %v524 = vunpack.c.l.bf16 %v522
    %v525 = vmul.f32 %v523, %v524
    %v526 = vpack.c.bf16 %v525, %v525
    %v528 = vpack.i.b16 %v518, %v518
    %v530 = vperm.slane %v528, 0
    %v531 = vunpack.c.l.bf16 %v526
    %v532 = vunpack.c.l.bf16 %v530
    %v533 = vadd.f32 %v531, %v532
    %v534 = vpack.c.bf16 %v533, %v533
    %v535 = vunpack.c.l.bf16 %v534
    %v536 = vmax.f32 %v535, 0.0
    %v537 = vpack.c.bf16 %v536, %v536
    %v538 = vld [vmem:[#allocation10] sm:$0xf]
    %v539 = vld [vmem:[#allocation10 + $0x4] sm:$0xf]
    %v540 = vld [vmem:[#allocation10 + $0x8] sm:$0xf]
    %v541 = vld [vmem:[#allocation10 + $0xc] sm:$0xf]
    %v542 = vld [vmem:[#allocation10 + $0x10] sm:$0xf]
    %v543 = vld [vmem:[#allocation10 + $0x14] sm:$0xf]
    %v544 = vld [vmem:[#allocation10 + $0x18] sm:$0xf]
    %v545 = vld [vmem:[#allocation10 + $0x1c] sm:$0xf]
    %v546 = vld [vmem:[#allocation10 + $0x20] sm:$0xf]
    %v547 = vld [vmem:[#allocation10 + $0x24] sm:$0xf]
    %v548 = vld [vmem:[#allocation10 + $0x28] sm:$0xf]
    %v549 = vld [vmem:[#allocation10 + $0x2c] sm:$0xf]
    %v550 = vld [vmem:[#allocation10 + $0x30] sm:$0xf]
    %v551 = vld [vmem:[#allocation10 + $0x34] sm:$0xf]
    %v552 = vld [vmem:[#allocation10 + $0x38] sm:$0xf]
    %v553 = vld [vmem:[#allocation10 + $0x3c] sm:$0xf]
    %v570 = vunpack.c.l.b16 %v538
    %v571 = vunpack.c.l.b16 %v539
    %v572 = vunpack.c.l.b16 %v540
    %v573 = vunpack.c.l.b16 %v541
    %v574 = vunpack.c.l.b16 %v542
    %v575 = vunpack.c.l.b16 %v543
    %v576 = vunpack.c.l.b16 %v544
    %v577 = vunpack.c.l.b16 %v545
    %v578 = vunpack.c.l.b16 %v546
    %v579 = vunpack.c.l.b16 %v547
    %v580 = vunpack.c.l.b16 %v548
    %v581 = vunpack.c.l.b16 %v549
    %v582 = vunpack.c.l.b16 %v550
    %v583 = vunpack.c.l.b16 %v551
    %v584 = vunpack.c.l.b16 %v552
    %v585 = vunpack.c.l.b16 %v553
    %v586 = vpack.c.b16 %v571, %v570
    %v587 = vpack.c.b16 %v573, %v572
    %v588 = vpack.c.b16 %v575, %v574
    %v589 = vpack.c.b16 %v577, %v576
    %v590 = vpack.c.b16 %v579, %v578
    %v591 = vpack.c.b16 %v581, %v580
    %v592 = vpack.c.b16 %v583, %v582
    %v593 = vpack.c.b16 %v585, %v584
    %602 = vmatpush.bf16.msra.mxu0 %v593
    %603 = vmatpush.bf16.msra.mxu0 %v592
    %604 = vmatpush.bf16.msra.mxu0 %v591
    %605 = vmatpush.bf16.msra.mxu0 %v590
    %606 = vmatpush.bf16.msra.mxu0 %v589
    %607 = vmatpush.bf16.msra.mxu0 %v588
    %608 = vmatpush.bf16.msra.mxu0 %v587
    %609 = vmatpush.bf16.msra.mxu0 %v586
    %610 = vmatmul.bf16.gmra.mxu0 %v537
    %v611 = vpop.f32.mrf.mxu0
    %v612 = vadd.f32 0.0, %v611
    %v613 = vpop.f32.mrf.mxu0
    %614 = vdwg.mxu0
    %v615 = vld [vmem:[%s8] sm:$0x1]
    %v616 = vld [vmem:[%s9] sm:$0x1]
    %v617 = vrot.slane %v612, 4
    %v618 = vadd.f32 %v612, %v617
    %v619 = vrot.slane %v618, 2
    %v620 = vadd.f32 %v618, %v619
    %v621 = vrot.slane %v620, 1
    %v622 = vadd.f32 %v620, %v621
    %v623 = vmul.f32 %v612, %v612
    %v624 = vrot.slane %v623, 4
    %v625 = vadd.f32 %v623, %v624
    %v626 = vrot.slane %v625, 2
    %v627 = vadd.f32 %v625, %v626
    %v628 = vrot.slane %v627, 1
    %v629 = vadd.f32 %v627, %v628
    %v630 = vmul.f32 %v622, 0.125
    %v631 = vmul.f32 %v629, 0.125
    %v632 = vmul.f32 %v630, %v630
    %v633 = vsub.f32 %v631, %v632
    %v634 = vmax.f32 %v633, 0.0
    %v635 = vadd.f32 %v634, 1e-05
    %v636 = vrsqrt.pop %v635
    %v637 = vmul.f32 %v636, %v635
    %v638 = vmul.f32 %v637, %v636
    %v639 = vmul.f32 0.5, %v638
    %v640 = vsub.f32 1.5, %v639
    %v641 = vmul.f32 %v636, %v640
    %vm642 = vweird.f32 %v635
    %vm643 = vweird.f32 %v636
    %vm644 = vmor %vm642, %vm643
    %v645 = vsel %vm644, %v636, %v641
    %v646 = vmul.f32 %v615, %v645
    %v647 = vmul.f32 %v630, %v646
    %v648 = vsub.f32 %v616, %v647
    %v649 = vpack.c.bf16 %v612, %v612
    %v650 = vpack.c.bf16 %v646, %v646
    %v651 = vpack.c.bf16 %v648, %v648
    %v653 = vpack.i.b16 %v650, %v650
    %v655 = vperm.slane %v653, 0
    %v656 = vunpack.c.l.bf16 %v649
    %v657 = vunpack.c.l.bf16 %v655
    %v658 = vmul.f32 %v656, %v657
    %v659 = vpack.c.bf16 %v658, %v658
    %v661 = vpack.i.b16 %v651, %v651
    %v663 = vperm.slane %v661, 0
    %v664 = vunpack.c.l.bf16 %v659
    %v665 = vunpack.c.l.bf16 %v663
    %v666 = vadd.f32 %v664, %v665
    %v667 = vpack.c.bf16 %v666, %v666
    %v668 = vunpack.c.l.bf16 %v667
    %v669 = vmax.f32 %v668, 0.0
    %v670 = vpack.c.bf16 %v669, %v669
    %v671 = vld [vmem:[#allocation11] sm:$0xf]
    %v672 = vld [vmem:[#allocation11 + $0x4] sm:$0xf]
    %v673 = vld [vmem:[#allocation11 + $0x8] sm:$0xf]
    %v674 = vld [vmem:[#allocation11 + $0xc] sm:$0xf]
    %v675 = vld [vmem:[#allocation11 + $0x10] sm:$0xf]
    %v676 = vld [vmem:[#allocation11 + $0x14] sm:$0xf]
    %v677 = vld [vmem:[#allocation11 + $0x18] sm:$0xf]
    %v678 = vld [vmem:[#allocation11 + $0x1c] sm:$0xf]
    %v679 = vld [vmem:[#allocation11 + $0x20] sm:$0xf]
    %v680 = vld [vmem:[#allocation11 + $0x24] sm:$0xf]
    %v681 = vld [vmem:[#allocation11 + $0x28] sm:$0xf]
    %v682 = vld [vmem:[#allocation11 + $0x2c] sm:$0xf]
    %v683 = vld [vmem:[#allocation11 + $0x30] sm:$0xf]
    %v684 = vld [vmem:[#allocation11 + $0x34] sm:$0xf]
    %v685 = vld [vmem:[#allocation11 + $0x38] sm:$0xf]
    %v686 = vld [vmem:[#allocation11 + $0x3c] sm:$0xf]
    %v687 = vld [vmem:[%s11] sm:$0x1]
    %v689 = vperm.slane %v687, 0
    %v707 = vunpack.c.l.b16 %v671
    %v708 = vunpack.c.l.b16 %v672
    %v709 = vunpack.c.l.b16 %v673
    %v710 = vunpack.c.l.b16 %v674
    %v711 = vunpack.c.l.b16 %v675
    %v712 = vunpack.c.l.b16 %v676
    %v713 = vunpack.c.l.b16 %v677
    %v714 = vunpack.c.l.b16 %v678
    %v715 = vunpack.c.l.b16 %v679
    %v716 = vunpack.c.l.b16 %v680
    %v717 = vunpack.c.l.b16 %v681
    %v718 = vunpack.c.l.b16 %v682
    %v719 = vunpack.c.l.b16 %v683
    %v720 = vunpack.c.l.b16 %v684
    %v721 = vunpack.c.l.b16 %v685
    %v722 = vunpack.c.l.b16 %v686
    %v723 = vpack.c.b16 %v708, %v707
    %v724 = vpack.c.b16 %v710, %v709
    %v725 = vpack.c.b16 %v712, %v711
    %v726 = vpack.c.b16 %v714, %v713
    %v727 = vpack.c.b16 %v716, %v715
    %v728 = vpack.c.b16 %v718, %v717
    %v729 = vpack.c.b16 %v720, %v719
    %v730 = vpack.c.b16 %v722, %v721
    %739 = vmatpush.bf16.msra.mxu0 %v730
    %740 = vmatpush.bf16.msra.mxu0 %v729
    %741 = vmatpush.bf16.msra.mxu0 %v728
    %742 = vmatpush.bf16.msra.mxu0 %v727
    %743 = vmatpush.bf16.msra.mxu0 %v726
    %744 = vmatpush.bf16.msra.mxu0 %v725
    %745 = vmatpush.bf16.msra.mxu0 %v724
    %746 = vmatpush.bf16.msra.mxu0 %v723
    %747 = vmatmul.bf16.gmra.mxu0 %v670
    %v748 = vpop.f32.mrf.mxu0
    %v749 = vadd.f32 %v689, %v748
    %v750 = vpop.f32.mrf.mxu0
    %751 = vdwg.mxu0
    %vm752 = vcmask 392192
    %753 = vst.msk [vmem:[#allocation13] sm:$0xff] %vm752, %v749
    // Predicated region
    $region74: #{tpu_custom_call.1} parent=1 // pred_check
      _
    $region75: #{tpu_custom_call.1} parent=1 // pred_check_branch
      %755 = sbr.rel (0) target = $region77
    $region76: #{tpu_custom_call.1} parent=1 // pred_region
      %757 = vsyncadd [#allocation4], 0
      %s759 = sshll.u32 [#allocation13], 4
      %s760 = int_to_ptr.vmem [resolvable:$true] %s759
      %s761 = sshll.u32 %s12, 4
      %s762 = int_to_ptr.hbm [resolvable:$true] %s761
      %764 = dma.vmem_to_hbm [thread:$0]  %s760, 128, %s762, [#allocation4]
    $region77: #{tpu_custom_call.1} parent=1 // pred_fallthru
      _
    // Predicated region
    $region78: #{tpu_custom_call.1} parent=1 // pred_check
      _
    $region79: #{tpu_custom_call.1} parent=1 // pred_check_branch
      %766 = sbr.rel (0) target = $region81
    $region80: #{tpu_custom_call.1} parent=1 // pred_region
      %768 = dma.done [#allocation4], 128
    $region81: #{tpu_custom_call.1} parent=1 // pred_fallthru
      _
    %769 = vsyncpa [#allocation3], 1
    %770 = vsyncpa [#allocation6], 1
    %771 = vsyncpa [#allocation9], 1
    %772 = vsyncpa [#allocation12], 1
    %773 = vsyncpa [#allocation4], 1

</llo_original>
